<compile_context>
chip_gen: v7x
topology: tpu7x:2x2x1
jax: 0.10.0
libtpu: 0.0.40
codegen_flags: <defaults>
</compile_context>

<pallas_src>
import jax
import jax.numpy as jnp
from jax.experimental import pallas as pl
from jax.experimental.pallas import tpu as pltpu


def _pe_add_kernel(x_ref, pe_ref, o_ref):
    # x_ref/o_ref: (B, chunk); pe_ref: (1, chunk). Broadcast add on the VPU.
    o_ref[...] = x_ref[...] + pe_ref[...]


def make_positional_encoding_table(d_model, max_len=100, dtype=jnp.float32):
    """Deterministic buffer construction, mirrors the PyTorch __init__."""
    position = jnp.arange(0, max_len, dtype=jnp.float32)[:, None]      # (max_len, 1)
    div = jnp.exp(
        jnp.arange(0, d_model, 2, dtype=jnp.float32)
        * (-jnp.log(jnp.float32(10000.0)) / d_model)
    )                                                                   # (ceil(d/2),)
    angles = position * div                                             # (max_len, ceil(d/2))
    pe = jnp.zeros((max_len, d_model), dtype=jnp.float32)
    pe = pe.at[:, 0::2].set(jnp.sin(angles))
    pe = pe.at[:, 1::2].set(jnp.cos(angles)[:, : d_model // 2])
    return pe.astype(dtype)                                             # (max_len, d_model)


def _pick_chunk(flat_len, batch, itemsize, vmem_budget_bytes):
    """Largest 128-aligned divisor of flat_len whose *double-buffered* working
    set (x-in + out, each (B, chunk), plus pe (1, chunk)) fits the budget."""
    if flat_len % 128 != 0:
        # Full-extent block is always layout-legal; fine for small F.
        # TODO(synk): for very large, non-128-divisible F, tile along S instead.
        return flat_len
    # Bytes consumed per lane-column across all pipelined buffers:
    #   2 x-in buffers * B rows + 2 out buffers * B rows + 2 pe buffers * 1 row
    bytes_per_col = itemsize * (2 * batch + 2 * batch + 2)
    cap = max(128, (vmem_budget_bytes // max(bytes_per_col, 1)) // 128 * 128)
    c = min(flat_len, cap)
    while c >= 128:
        if flat_len % c == 0:
            return c
        c -= 128
    return 128


def positional_encoding_forward(x, pe, *, vmem_budget_bytes=36 * 1024 * 1024):
    """x: (B, S, D), pe: (max_len, D). Returns x + pe[:S] broadcast over batch."""
    B, S, D = x.shape
    F = S * D

    # Parameter glue stays in JAX: slice + dtype-match + flatten (tiny vs. x traffic,
    # and the reshapes are free row-major views).
    pe_flat = pe[:S].astype(x.dtype).reshape(1, F)      # (1, S*D)
    x_flat = x.reshape(B, F)                            # (B, S*D), lane-dense layout

    chunk = _pick_chunk(F, B, x.dtype.itemsize, vmem_budget_bytes)
    grid = (F // chunk,) if F % chunk == 0 else (1,)

    out_flat = pl.pallas_call(
        _pe_add_kernel,
        out_shape=jax.ShapeDtypeStruct((B, F), x.dtype),
        grid=grid,
        in_specs=[
            pl.BlockSpec((B, chunk), lambda i: (0, i)),   # x tile, full batch per block
            pl.BlockSpec((1, chunk), lambda i: (0, i)),   # pe tile, fetched once per chunk
        ],
        out_specs=pl.BlockSpec((B, chunk), lambda i: (0, i)),
        compiler_params=pltpu.CompilerParams(
            dimension_semantics=("parallel",),
            # Above the scoped defaults on every chip, with headroom under
            # v7x's 64 MiB physical VMEM per TensorCore.
            vmem_limit_bytes=48 * 1024 * 1024,
        ),
    )(x_flat, pe_flat)

    return out_flat.reshape(B, S, D)


if __name__ == "__main__":
    key = jax.random.PRNGKey(0)

    # Demo shape consistent with the module: batch=2, seq=8, hidden=32.
    B, S, D = 2, 8, 32
    max_len = 100

    x = jax.random.normal(key, (B, S, D), dtype=jnp.float32)
    pe = make_positional_encoding_table(D, max_len=max_len, dtype=jnp.float32)

    out = jax.block_until_ready(positional_encoding_forward(x, pe))
    ref = x + pe[None, :S, :]
    assert out.shape == (B, S, D)
    assert jnp.allclose(out, ref, atol=1e-6), "mismatch vs reference (single-tile path)"

    # Second case with a tiny VMEM budget to force a multi-chunk grid
    # (exercises the pipelined/tiled path: F=1024 -> chunk=256 -> 4 grid steps).
    B2, S2, D2 = 2, 16, 64
    x2 = jax.random.normal(jax.random.PRNGKey(1), (B2, S2, D2), dtype=jnp.float32)
    pe2 = make_positional_encoding_table(D2, max_len=max_len, dtype=jnp.float32)
    out2 = jax.block_until_ready(
        positional_encoding_forward(x2, pe2, vmem_budget_bytes=12 * 1024)
    )
    ref2 = x2 + pe2[None, :S2, :]
    assert jnp.allclose(out2, ref2, atol=1e-6), "mismatch vs reference (multi-tile path)"

    # bf16 path: add must stay in bf16 (pe cast in wrapper), compare vs bf16 reference.
    x3 = jax.random.normal(jax.random.PRNGKey(2), (B2, S2, D2), dtype=jnp.bfloat16)
    out3 = jax.block_until_ready(positional_encoding_forward(x3, pe2))
    ref3 = x3 + pe2[None, :S2, :].astype(jnp.bfloat16)
    assert jnp.allclose(out3.astype(jnp.float32), ref3.astype(jnp.float32)), \
        "mismatch vs reference (bf16 path)"

    print("KERNEL_OK")
</pallas_src>

<mosaic_0001>
module attributes {stable_mosaic.version = 11 : i64} {
  func.func @_pe_add_kernel(%arg0: i32, %arg1: memref<2x256xf32, #tpu.memory_space<vmem>>, %arg2: memref<1x256xf32, #tpu.memory_space<vmem>>, %arg3: memref<2x256xf32, #tpu.memory_space<vmem>>) attributes {dimension_semantics = [#tpu.dimension_semantics<parallel>], iteration_bounds = array<i64: 1>, scalar_prefetch = 0 : i64, scratch_operands = 0 : i64, tpu.core_type = #tpu.core_type<tc>, window_params = [{transform_indices = @transform_0, window_bounds = array<i64: 2, 256>}, {transform_indices = @transform_1, window_bounds = array<i64: 1, 256>}, {transform_indices = @transform_2, window_bounds = array<i64: 2, 256>}]} {
    %c0 = arith.constant 0 : index
    %c0_0 = arith.constant 0 : index
    %0 = vector.load %arg1[%c0, %c0_0] : memref<2x256xf32, #tpu.memory_space<vmem>>, vector<2x256xf32>
    %c0_1 = arith.constant 0 : index
    %c0_2 = arith.constant 0 : index
    %1 = vector.load %arg2[%c0_1, %c0_2] : memref<1x256xf32, #tpu.memory_space<vmem>>, vector<1x256xf32>
    %2 = vector.broadcast %1 : vector<1x256xf32> to vector<2x256xf32>
    %3 = arith.addf %0, %2 : vector<2x256xf32>
    %c0_3 = arith.constant 0 : index
    %c0_4 = arith.constant 0 : index
    %4 = vector.load %arg3[%c0_3, %c0_4] : memref<2x256xf32, #tpu.memory_space<vmem>>, vector<2x256xf32>
    tpu.vector_store %arg3[%c0_3, %c0_4], %3 {strides = array<i32>} : memref<2x256xf32, #tpu.memory_space<vmem>>, vector<2x256xf32>,
    return
  }
  func.func @transform_0(%arg0: i32) -> (i32, i32) {
    %c0_i32 = arith.constant 0 : i32
    %c0_i32_0 = arith.constant 0 : i32
    return %c0_i32, %arg0 : i32, i32
  }
  func.func @transform_1(%arg0: i32) -> (i32, i32) {
    %c0_i32 = arith.constant 0 : i32
    %c0_i32_0 = arith.constant 0 : i32
    return %c0_i32, %arg0 : i32, i32
  }
  func.func @transform_2(%arg0: i32) -> (i32, i32) {
    %c0_i32 = arith.constant 0 : i32
    %c0_i32_0 = arith.constant 0 : i32
    return %c0_i32, %arg0 : i32, i32
  }
}

</mosaic_0001>

<llo_original>
// kernel: tpu_custom_call.1
$region0: #{tpu_custom_call.1}
  #allocation0 [shape = 'u32[]', space=smem, size = 0x4, offset = 0x4, fixed_abs, tag = 'smem constant byte address 0x4 - core index']
  #allocation1 [shape = 'u32[144,128]{1,0:T(1,128)}', space=vmem, size = 0x12000, scoped, tag = 'internal scratch']
  %s0 = inlined_call_operand.hbm [shape: f32[2,256], index: 0, kind: input, shape index: {}]
  %s1 = inlined_call_operand.vmem [shape: f32[1,256], index: 1, kind: input, shape index: {}]
  %s2 = inlined_call_operand.hbm [shape: f32[2,256], index: 2, kind: output, shape index: {}]
  %s3 = sld [smem:[#allocation0]]
  $region22: #{tpu_custom_call.1} parent=0
    _
  %s5 = ssub.s32 1, %s3
  %s6 = scalar_select 0, %s5, %s3
  $region1: #{tpu_custom_call.1} parent=0
    #allocation2 [shape = 'u8[2048]{0}', space=vmem, size = 0x800, scoped, tag = 'input window, operand 0, single buffered']
    #allocation3 [shape = 's32[1]{0}', space=sflag, size = 0x4, scoped, tag = 'scoped memory for tpu_custom_call.1']
    #allocation4 [shape = 's32[1]{0}', space=sflag, size = 0x4, scoped, tag = 'scoped memory for tpu_custom_call.1']
    #allocation5 [shape = 'u8[2048]{0}', space=vmem, size = 0x800, scoped, tag = 'output window, operand 0, single buffered']
    %7 = vsyncpa [#allocation3], 0
    %8 = vsyncpa [#allocation4], 0
    // Predicated region
    $region2: #{tpu_custom_call.1} parent=1 // pred_check
      _
    $region3: #{tpu_custom_call.1} parent=1 // pred_check_branch
      %10 = sbr.rel (0) target = $region5
    $region4: #{tpu_custom_call.1} parent=1 // pred_region
      %s12 = ssub.s32 64, 64
      %13 = vsyncadd [#allocation3], %s12
      %s15 = sshll.u32 [#allocation2], 4
      %s16 = int_to_ptr.vmem [resolvable:$true] %s15
      %18 = dma.hbm_to_vmem [thread:$0]  %s0, 64, %s16, [#allocation3]
    $region5: #{tpu_custom_call.1} parent=1 // pred_fallthru
      _
    // Predicated region
    $region6: #{tpu_custom_call.1} parent=1 // pred_check
      _
    $region7: #{tpu_custom_call.1} parent=1 // pred_check_branch
      %20 = sbr.rel (0) target = $region9
    $region8: #{tpu_custom_call.1} parent=1 // pred_region
      _
    $region9: #{tpu_custom_call.1} parent=1 // pred_fallthru
      _
    // Predicated region
    $region10: #{tpu_custom_call.1} parent=1 // pred_check
      _
    $region11: #{tpu_custom_call.1} parent=1 // pred_check_branch
      %22 = sbr.rel (0) target = $region13
    $region12: #{tpu_custom_call.1} parent=1 // pred_region
      %23 = dma.done [#allocation3], 64
    $region13: #{tpu_custom_call.1} parent=1 // pred_fallthru
      _
    %v24 = vld [vmem:[#allocation2] sm:$0xf]
    %v25 = vld [vmem:[%s1] sm:$0x3]
    %v27 = vlaneseq
    %v28 = vshrl.u32 %v27, 7
    %v29 = vsub.s32 0, %v28
    %v30 = vrot.slane %v25, %v29
    %v31 = vlaneseq
    %v32 = vshrl.u32 %v31, 7
    %v33 = vsub.s32 1, %v32
    %v34 = vrot.slane %v25, %v33
    %v35 = vcombine.low %v30, %v34
    %v37 = vunpack.c.l.s4 1983009808
    %v38 = vunpack.c.0.s8 %v37
    %v39 = vlaneseq
    %v40 = vshrl.u32 %v39, 7
    %v41 = vsub.s32 %v38, %v40
    %v42 = vrot.slane %v35, %v41
    %v44 = vadd.f32 %v24, %v42
    %45 = vst [vmem:[#allocation5] sm:$0xf] %v44
    // Predicated region
    $region14: #{tpu_custom_call.1} parent=1 // pred_check
      _
    $region15: #{tpu_custom_call.1} parent=1 // pred_check_branch
      %47 = sbr.rel (0) target = $region17
    $region16: #{tpu_custom_call.1} parent=1 // pred_region
      %s49 = ssub.s32 64, 64
      %50 = vsyncadd [#allocation4], %s49
      %s52 = sshll.u32 [#allocation5], 4
      %s53 = int_to_ptr.vmem [resolvable:$true] %s52
      %55 = dma.vmem_to_hbm [thread:$0]  %s53, 64, %s2, [#allocation4]
    $region17: #{tpu_custom_call.1} parent=1 // pred_fallthru
      _
    // Predicated region
    $region18: #{tpu_custom_call.1} parent=1 // pred_check
      _
    $region19: #{tpu_custom_call.1} parent=1 // pred_check_branch
      %57 = sbr.rel (0) target = $region21
    $region20: #{tpu_custom_call.1} parent=1 // pred_region
      %58 = dma.done [#allocation4], 64
    $region21: #{tpu_custom_call.1} parent=1 // pred_fallthru
      _
    %59 = vsyncpa [#allocation3], 1
    %60 = vsyncpa [#allocation4], 1

</llo_original>
